<compile_context>
chip_gen: v7x
topology: tpu7x:2x2x1
jax: 0.10.0
libtpu: 0.0.40
codegen_flags: <defaults>
</compile_context>

<pallas_src>
import functools

import numpy as np
import jax
import jax.numpy as jnp
from jax import lax
from jax.experimental import pallas as pl
from jax.experimental.pallas import tpu as pltpu

CODES = {"A": 0, "C": 1, "G": 2, "T": 3, "N": 4}
N_CLASSES = 4               # only A,C,G,T get a row; 'N' -> all-zero column
_SENTINEL = 4               # padding code ('N') -> all-zero output column
_TL_CAP = 262144            # max lanes per tile -> 4 MiB f32 output per step
_MIN_GRID_STEPS = 4         # >= 2 grid steps per TensorCore on v7x megacore
_PALLAS_MIN_LEN = 65536     # below this, plain XLA beats pallas_call dispatch
_VMEM_LIMIT_BYTES = 32 * 1024 * 1024


def n2id(n: str) -> int:
    return CODES[n.upper()]


# --- vectorized host-side string -> code translation (256-entry LUT) ---------
# Note: characters outside ACGTN/acgtn map to the sentinel (all-zero column)
# instead of raising like the PyTorch reference would.
_LUT = np.full(256, _SENTINEL, dtype=np.int8)
for _ch, _code in CODES.items():
    _LUT[ord(_ch)] = _code
    _LUT[ord(_ch.lower())] = _code


def seq_to_codes(seq: str) -> np.ndarray:
    """str -> int8 codes in {0..4}, vectorized (no Python per-char loop)."""
    return _LUT[np.frombuffer(seq.encode("ascii"), dtype=np.uint8)]


# --- Pallas kernel ------------------------------------------------------------
def _one_hot_t_kernel(codes_ref, out_ref):
    # codes_ref: (1, TL) int8 in VMEM ; out_ref: (N_CLASSES, TL) in VMEM.
    # Fused one-hot + transpose: out[c, i] = 1 iff codes[i] == c.
    # The class-id iota is only (4, 1) (broadcast inside the ==), so the only
    # full-width temporaries are the (1, TL) int32 codes and the (4, TL) bool
    # mask — no (4, TL) int32 iota is materialized.
    class_ids = lax.broadcasted_iota(jnp.int32, (N_CLASSES, 1), 0)   # (4, 1)
    codes = codes_ref[...].astype(jnp.int32)                          # (1, TL)
    # Code 4 ('N' / padding) matches no row 0..3 -> all-zero column, exactly
    # like F.one_hot(..., 5)[:, :4].T.
    out_ref[...] = (codes == class_ids).astype(out_ref.dtype)


# --- host-side helpers ---------------------------------------------------------
def _round_up(x: int, m: int) -> int:
    return ((x + m - 1) // m) * m


def _select_tl(L: int) -> int:
    """Lane-dense tile (multiple of 128): big enough to amortize per-step
    overhead, small enough to keep >= _MIN_GRID_STEPS steps and fit VMEM."""
    tl = _round_up(max(pl.cdiv(L, _MIN_GRID_STEPS), 1), 128)
    return max(128, min(_TL_CAP, tl))


@functools.lru_cache(maxsize=128)
def _build_seq2tensor_call(L: int, TL: int, out_dtype_name: str):
    """Build + jit the pallas_call for a given (L, TL, dtype); cached so
    repeated calls at the same shape do not re-trace."""
    out_dtype = np.dtype(out_dtype_name)
    n_blocks = pl.cdiv(L, TL)
    call = pl.pallas_call(
        _one_hot_t_kernel,
        out_shape=jax.ShapeDtypeStruct((N_CLASSES, L), out_dtype),
        grid=(n_blocks,),
        # Input is host-padded to n_blocks*TL, so every input block is fully
        # in-bounds; the output's final (possibly partial) block writeback is
        # masked by Pallas — no post-kernel slice copy.
        in_specs=[pl.BlockSpec((1, TL), lambda i: (0, i))],
        out_specs=pl.BlockSpec((N_CLASSES, TL), lambda i: (0, i)),
        compiler_params=pltpu.CompilerParams(
            dimension_semantics=("parallel",),
            vmem_limit_bytes=_VMEM_LIMIT_BYTES),
    )
    return jax.jit(call)


def seq2tensor_pallas(codes, out_dtype=jnp.float32, tl=None) -> jax.Array:
    """codes: (L,) int-like in {0..4} -> (N_CLASSES, L) one-hot, transposed.

    Tiled over L with a 1-D parallel grid; lane-dense int8 input tiles.
    `tl` (multiple of 128) overrides the automatic tile-size choice (testing).
    """
    codes = np.asarray(codes, dtype=np.int8).reshape(-1)
    L = int(codes.shape[0])
    TL = int(tl) if tl is not None else _select_tl(L)
    L_pad = _round_up(max(L, 1), TL)          # = n_blocks * TL
    if L_pad != L:
        pad = np.full(L_pad - L, _SENTINEL, dtype=np.int8)
        codes = np.concatenate([codes, pad])
    codes2d = jnp.asarray(codes.reshape(1, L_pad))   # int8, (1, L_pad)
    return _build_seq2tensor_call(L, TL, np.dtype(out_dtype).name)(codes2d)


def seq2tensor_xla(codes) -> jax.Array:
    """Plain-XLA path for short sequences (pallas_call dispatch dominates)."""
    codes = jnp.asarray(codes, dtype=jnp.int32).reshape(-1)
    class_ids = jnp.arange(N_CLASSES, dtype=jnp.int32)[:, None]
    return (codes[None, :] == class_ids).astype(jnp.float32)


def seq2tensor(seq: str) -> jax.Array:
    """Full Seq2Tensor.forward equivalent: str -> (4, len(seq)) float32."""
    codes = seq_to_codes(seq)
    if codes.shape[0] >= _PALLAS_MIN_LEN:
        return seq2tensor_pallas(codes)
    return seq2tensor_xla(codes)


# --- reference + demo ---------------------------------------------------------
def _reference(codes: np.ndarray) -> np.ndarray:
    """Mirrors the PyTorch forward: one_hot(5)[:, :4].float().T"""
    L = codes.shape[0]
    ref = np.zeros((L, 5), dtype=np.float32)
    ref[np.arange(L), codes.astype(np.int64)] = 1.0
    return ref[:, :4].T  # (4, L)


if __name__ == "__main__":
    key = jax.random.PRNGKey(0)
    alphabet = "ACGTN"

    # --- small demo sequence (L=16), matching the module's typical use -------
    k1, k2 = jax.random.split(key)
    idx16 = np.asarray(jax.random.randint(k1, (16,), 0, 5))
    seq16 = "".join(alphabet[int(i)] for i in idx16)
    codes16 = seq_to_codes(seq16)

    # Exercise the Pallas kernel directly (single padded block: 16 -> 128).
    out16 = jax.block_until_ready(seq2tensor_pallas(codes16))
    assert out16.shape == (4, 16) and out16.dtype == jnp.float32
    np.testing.assert_allclose(np.asarray(out16), _reference(codes16), rtol=0, atol=0)

    # Dispatch path (short sequence -> XLA) must agree too.
    out16_d = jax.block_until_ready(seq2tensor(seq16))
    np.testing.assert_allclose(np.asarray(out16_d), _reference(codes16), rtol=0, atol=0)

    # --- longer sequence (L=1000, not a multiple of 128) ---------------------
    idx1k = np.asarray(jax.random.randint(k2, (1000,), 0, 5))
    seq1k = "".join(alphabet[int(i)] for i in idx1k)
    codes1k = seq_to_codes(seq1k)

    # Auto tiling: TL=256, grid=4, masked partial final output block.
    out1k = jax.block_until_ready(seq2tensor_pallas(codes1k))
    assert out1k.shape == (4, 1000) and out1k.dtype == jnp.float32
    np.testing.assert_allclose(np.asarray(out1k), _reference(codes1k), rtol=0, atol=0)

    # Forced small tiles (TL=128 -> 8 grid steps) to exercise the pipelined
    # multi-step grid + partial-final-block writeback path.
    out1k_s = jax.block_until_ready(seq2tensor_pallas(codes1k, tl=128))
    np.testing.assert_allclose(np.asarray(out1k_s), _reference(codes1k), rtol=0, atol=0)

    print("KERNEL_OK")
</pallas_src>

<mosaic_0001>
module attributes {stable_mosaic.version = 11 : i64} {
  func.func @_one_hot_t_kernel(%arg0: i32, %arg1: memref<1x128xi8, #tpu.memory_space<vmem>>, %arg2: memref<4x128xf32, #tpu.memory_space<vmem>>) attributes {dimension_semantics = [#tpu.dimension_semantics<parallel>], iteration_bounds = array<i64: 1>, scalar_prefetch = 0 : i64, scratch_operands = 0 : i64, tpu.core_type = #tpu.core_type<tc>, window_params = [{transform_indices = @transform_0, window_bounds = array<i64: 1, 128>}, {transform_indices = @transform_1, window_bounds = array<i64: 4, 128>}]} {
    %0 = tpu.iota {dimensions = array<i32: 0>} : vector<4x1xi32>
    %c0 = arith.constant 0 : index
    %c0_0 = arith.constant 0 : index
    %1 = vector.load %arg1[%c0, %c0_0] : memref<1x128xi8, #tpu.memory_space<vmem>>, vector<1x128xi8>
    %2 = arith.extsi %1 : vector<1x128xi8> to vector<1x128xi32>
    %3 = vector.broadcast %2 : vector<1x128xi32> to vector<4x128xi32>
    %4 = vector.broadcast %0 : vector<4x1xi32> to vector<4x128xi32>
    %5 = arith.cmpi eq, %3, %4 : vector<4x128xi32>
    %6 = arith.extui %5 : vector<4x128xi1> to vector<4x128xi32>
    %7 = arith.sitofp %6 : vector<4x128xi32> to vector<4x128xf32>
    %c0_1 = arith.constant 0 : index
    %c0_2 = arith.constant 0 : index
    %8 = vector.load %arg2[%c0_1, %c0_2] : memref<4x128xf32, #tpu.memory_space<vmem>>, vector<4x128xf32>
    tpu.vector_store %arg2[%c0_1, %c0_2], %7 {strides = array<i32>} : memref<4x128xf32, #tpu.memory_space<vmem>>, vector<4x128xf32>,
    return
  }
  func.func @transform_0(%arg0: i32) -> (i32, i32) {
    %c0_i32 = arith.constant 0 : i32
    %c0_i32_0 = arith.constant 0 : i32
    return %c0_i32, %arg0 : i32, i32
  }
  func.func @transform_1(%arg0: i32) -> (i32, i32) {
    %c0_i32 = arith.constant 0 : i32
    %c0_i32_0 = arith.constant 0 : i32
    return %c0_i32, %arg0 : i32, i32
  }
}

</mosaic_0001>

<llo_original>
// kernel: tpu_custom_call.1
$region0: #{tpu_custom_call.1}
  #allocation0 [shape = 'u32[]', space=smem, size = 0x4, offset = 0x4, fixed_abs, tag = 'smem constant byte address 0x4 - core index']
  #allocation1 [shape = 'u32[144,128]{1,0:T(1,128)}', space=vmem, size = 0x12000, scoped, tag = 'internal scratch']
  %s0 = inlined_call_operand.hbm [shape: s8[1,128], index: 0, kind: input, shape index: {}]
  %s1 = inlined_call_operand.hbm [shape: f32[4,16], index: 1, kind: output, shape index: {}]
  %s2 = sld [smem:[#allocation0]]
  $region18: #{tpu_custom_call.1} parent=0
    _
  %s4 = ssub.s32 1, %s2
  %s5 = scalar_select 0, %s4, %s2
  $region1: #{tpu_custom_call.1} parent=0
    #allocation2 [shape = 'u8[512]{0}', space=vmem, size = 0x400, scoped, tag = 'input window, operand 0, single buffered']
    #allocation3 [shape = 's32[1]{0}', space=sflag, size = 0x4, scoped, tag = 'scoped memory for tpu_custom_call.1']
    #allocation4 [shape = 's32[1]{0}', space=sflag, size = 0x4, scoped, tag = 'scoped memory for tpu_custom_call.1']
    #allocation5 [shape = 'u8[2048]{0}', space=vmem, size = 0x800, scoped, tag = 'output window, operand 0, single buffered']
    %6 = vsyncpa [#allocation3], 0
    %7 = vsyncpa [#allocation4], 0
    // Predicated region
    $region2: #{tpu_custom_call.1} parent=1 // pred_check
      _
    $region3: #{tpu_custom_call.1} parent=1 // pred_check_branch
      %9 = sbr.rel (0) target = $region5
    $region4: #{tpu_custom_call.1} parent=1 // pred_region
      %s11 = ssub.s32 16, 16
      %12 = vsyncadd [#allocation3], %s11
      %s14 = sshll.u32 [#allocation2], 4
      %s15 = int_to_ptr.vmem [resolvable:$true] %s14
      %17 = dma.hbm_to_vmem [thread:$0]  %s0, 16, %s15, [#allocation3]
    $region5: #{tpu_custom_call.1} parent=1 // pred_fallthru
      _
    // Predicated region
    $region6: #{tpu_custom_call.1} parent=1 // pred_check
      _
    $region7: #{tpu_custom_call.1} parent=1 // pred_check_branch
      %19 = sbr.rel (0) target = $region9
    $region8: #{tpu_custom_call.1} parent=1 // pred_region
      %20 = dma.done [#allocation3], 16
    $region9: #{tpu_custom_call.1} parent=1 // pred_fallthru
      _
    %v21 = vlaneseq
    %v22 = vshrl.u32 %v21, 7
    %v23 = vld [vmem:[#allocation2] sm:$0x1]
    %v24 = vunpack.c.0.s8 %v23
    %v25 = vlaneseq
    %v26 = vshrl.u32 %v25, 7
    %v27 = vsub.s32 0, %v26
    %v28 = vrot.slane %v24, %v27
    %vm29 = vcmp.eq.s32.totalorder %v28, %v22
    %v30 = vsel %vm29, 1, 0
    %v31 = vcvt.s32.f32 %v30
    %32 = vst [vmem:[#allocation5] sm:$0xf] %v31
    // Predicated region
    $region10: #{tpu_custom_call.1} parent=1 // pred_check
      _
    $region11: #{tpu_custom_call.1} parent=1 // pred_check_branch
      %34 = sbr.rel (0) target = $region13
    $region12: #{tpu_custom_call.1} parent=1 // pred_region
      %s36 = ssub.s32 64, 64
      %37 = vsyncadd [#allocation4], %s36
      %s39 = sshll.u32 [#allocation5], 4
      %s40 = int_to_ptr.vmem [resolvable:$true] %s39
      %42 = dma.vmem_to_hbm [thread:$0]  %s40, 64, %s1, [#allocation4]
    $region13: #{tpu_custom_call.1} parent=1 // pred_fallthru
      _
    // Predicated region
    $region14: #{tpu_custom_call.1} parent=1 // pred_check
      _
    $region15: #{tpu_custom_call.1} parent=1 // pred_check_branch
      %44 = sbr.rel (0) target = $region17
    $region16: #{tpu_custom_call.1} parent=1 // pred_region
      %45 = dma.done [#allocation4], 64
    $region17: #{tpu_custom_call.1} parent=1 // pred_fallthru
      _
    %46 = vsyncpa [#allocation3], 1
    %47 = vsyncpa [#allocation4], 1

</llo_original>
